<compile_context>
chip_gen: v5e
topology: v5e:2x2
jax: 0.10.0
libtpu: 0.0.40
codegen_flags: <defaults>
</compile_context>

<pallas_src>
import jax
import jax.numpy as jnp
from jax.experimental import pallas as pl
from jax.experimental.pallas import tpu as pltpu


def _round_up(a: int, m: int) -> int:
    return (a + m - 1) // m * m


def _attention_kernel(x_ref, w_ref, ws_ref, aw_ref):
    # x_ref : (BB, T, H)  transformer output block (H on lanes, T on sublanes)
    # w_ref : (1, H)      nn.Linear(H, 1, bias=False).weight
    # ws_ref: (BB, H)     weighted-sum output block
    # aw_ref: (BB, T)     attention-weight output block
    x = x_ref[...].astype(jnp.float32)              # (BB, T, H)
    w = w_ref[...].astype(jnp.float32)              # (1, H)

    # Scores on the VPU: x streams in its natural layout, no per-batch MXU
    # weight loads, no transpose.  Result is dense 2-D (BB, T), T on lanes.
    s = jnp.sum(x * w[None, :, :], axis=-1)         # (BB, T)

    # Softmax over T (lane axis), f32, exact divide.
    m = jnp.max(s, axis=-1, keepdims=True)          # (BB, 1)
    e = jnp.exp(s - m)                              # (BB, T)
    p = e / jnp.sum(e, axis=-1, keepdims=True)      # (BB, T)

    aw_ref[...] = p.astype(aw_ref.dtype)

    # Weighted sum on the VPU: broadcast p over H, reduce over T (sublanes).
    ws = jnp.sum(p[:, :, None] * x, axis=1)         # (BB, H)
    ws_ref[...] = ws.astype(ws_ref.dtype)


def _budgets():
    """(x-tile budget bytes, scoped-VMEM limit bytes), gated per generation.

    v7x: 64 MiB physical VMEM per TC -> keep tiles small; v5e/v6e: 128 MiB.
    The HBM roofline plateaus well below these tile sizes anyway.
    """
    try:
        cap = getattr(pltpu.get_tpu_info(), "vmem_capacity_bytes", 64 << 20)
    except Exception:  # e.g. interpret mode / info unavailable
        cap = 64 << 20
    if cap >= (100 << 20):              # v5e / v6e (128 MiB physical)
        return 8 << 20, 64 << 20
    return 4 << 20, 40 << 20            # v7x (64 MiB physical per TC)


def _pick_block_b(batch: int, t: int, h: int, itemsize: int,
                  tile_budget_bytes: int) -> int:
    """Batch rows per grid step.

    Multiple of 8 (sublane tiling of the 2-D output blocks) unless batch <= 8
    in which case the block dim equals the full array dim (always legal).
    Capped so the grid keeps >= ~4 steps when batch permits (>= 2 per TC on
    v7x megacore, plus pipeline overlap on all generations).
    """
    if batch <= 8:
        return batch
    per_row = max(1, t * h * itemsize)
    bb = max(8, (tile_budget_bytes // per_row) // 8 * 8)
    cap = max(8, _round_up(pl.cdiv(batch, 4), 8))
    bb = min(bb, cap)
    return min(bb, _round_up(batch, 8))


def attention_forward(gru_output, weight):
    """gru_output: (B, T, H); weight: (1, H) (PyTorch nn.Linear(H,1).weight) or (H, 1).

    Returns (weighted_sum (B, H), attention_weights (B, T, 1)), matching the
    PyTorch Attention module's outputs.
    """
    B, T, H = gru_output.shape
    if weight.shape == (H, 1):
        weight = weight.T
    assert weight.shape == (1, H)

    tile_budget, vmem_limit = _budgets()
    BB = _pick_block_b(B, T, H, gru_output.dtype.itemsize, tile_budget)
    grid_b = pl.cdiv(B, BB)

    ws, aw = pl.pallas_call(
        _attention_kernel,
        out_shape=(
            jax.ShapeDtypeStruct((B, H), gru_output.dtype),
            jax.ShapeDtypeStruct((B, T), gru_output.dtype),
        ),
        grid_spec=pltpu.PrefetchScalarGridSpec(
            num_scalar_prefetch=0,
            grid=(grid_b,),
            in_specs=[
                pl.BlockSpec((BB, T, H), lambda b: (b, 0, 0)),  # x block
                pl.BlockSpec((1, H), lambda b: (0, 0)),         # shared weight
            ],
            out_specs=[
                pl.BlockSpec((BB, H), lambda b: (b, 0)),
                pl.BlockSpec((BB, T), lambda b: (b, 0)),
            ],
        ),
        compiler_params=pltpu.CompilerParams(
            dimension_semantics=("parallel",),
            vmem_limit_bytes=vmem_limit,
        ),
    )(gru_output, weight)

    return ws, aw[..., None]       # unsqueeze(-1) -> (B, T, 1)


def _reference(gru_output, weight):
    scores = jnp.einsum("bth,kh->bt", gru_output, weight)
    w = jax.nn.softmax(scores, axis=1)[..., None]
    return jnp.sum(w * gru_output, axis=1), w


if __name__ == "__main__":
    # Shapes consistent with CNN_TRANS_Model: Attention(hidden_size=494)
    # applied to a (B, T, 494) transformer-encoder output.  (T is 1 in the
    # real model after compress1; T=8 here to exercise the softmax, and B=20
    # exercises the multi-block grid with a ragged last batch block.)
    B, T, H = 20, 8, 494

    key = jax.random.PRNGKey(0)
    kx, kw = jax.random.split(key)
    gru_output = jax.random.normal(kx, (B, T, H), dtype=jnp.float32)
    # nn.Linear(hidden_size, 1, bias=False) weight, PyTorch layout (1, H).
    bound = 1.0 / (H ** 0.5)
    weight = jax.random.uniform(kw, (1, H), dtype=jnp.float32,
                                minval=-bound, maxval=bound)

    ws, aw = attention_forward(gru_output, weight)
    jax.block_until_ready((ws, aw))

    ws_ref, aw_ref = _reference(gru_output, weight)
    assert ws.shape == (B, H) and aw.shape == (B, T, 1)
    assert jnp.allclose(ws, ws_ref, atol=1e-4, rtol=1e-4)
    assert jnp.allclose(aw, aw_ref, atol=1e-5, rtol=1e-4)

    print("KERNEL_OK")
</pallas_src>

<mosaic_0001>
module attributes {stable_mosaic.version = 11 : i64} {
  func.func @_attention_kernel(%arg0: i32, %arg1: memref<8x8x494xf32, #tpu.memory_space<vmem>>, %arg2: memref<1x494xf32, #tpu.memory_space<vmem>>, %arg3: memref<8x494xf32, #tpu.memory_space<vmem>>, %arg4: memref<8x8xf32, #tpu.memory_space<vmem>>) attributes {dimension_semantics = [#tpu.dimension_semantics<parallel>], iteration_bounds = array<i64: 3>, scalar_prefetch = 0 : i64, scratch_operands = 0 : i64, tpu.core_type = #tpu.core_type<tc>, window_params = [{transform_indices = @transform_0, window_bounds = array<i64: 8, 8, 494>}, {pipeline_mode = #tpu.pipeline_mode<synchronous>, transform_indices = @transform_1, window_bounds = array<i64: 1, 494>}, {transform_indices = @transform_2, window_bounds = array<i64: 8, 494>}, {transform_indices = @transform_3, window_bounds = array<i64: 8, 8>}]} {
    %c0 = arith.constant 0 : index
    %c0_0 = arith.constant 0 : index
    %c0_1 = arith.constant 0 : index
    %0 = vector.load %arg1[%c0, %c0_0, %c0_1] : memref<8x8x494xf32, #tpu.memory_space<vmem>>, vector<8x8x494xf32>
    %c0_2 = arith.constant 0 : index
    %c0_3 = arith.constant 0 : index
    %1 = vector.load %arg2[%c0_2, %c0_3] : memref<1x494xf32, #tpu.memory_space<vmem>>, vector<1x494xf32>
    %2 = vector.shape_cast %1 : vector<1x494xf32> to vector<1x1x494xf32>
    %3 = vector.broadcast %2 : vector<1x1x494xf32> to vector<8x8x494xf32>
    %4 = arith.mulf %0, %3 : vector<8x8x494xf32>
    %cst = arith.constant dense<0.000000e+00> : vector<8x8xf32>
    %5 = vector.multi_reduction <add>, %4, %cst [2] : vector<8x8x494xf32> to vector<8x8xf32>
    %cst_4 = arith.constant dense<0xFF800000> : vector<8xf32>
    %6 = vector.multi_reduction <maximumf>, %5, %cst_4 [1] : vector<8x8xf32> to vector<8xf32>
    %7 = vector.shape_cast %6 : vector<8xf32> to vector<8x1xf32>
    %8 = vector.broadcast %7 : vector<8x1xf32> to vector<8x8xf32>
    %9 = arith.subf %5, %8 : vector<8x8xf32>
    %10 = math.exp %9 : vector<8x8xf32>
    %cst_5 = arith.constant dense<0.000000e+00> : vector<8xf32>
    %11 = vector.multi_reduction <add>, %10, %cst_5 [1] : vector<8x8xf32> to vector<8xf32>
    %12 = vector.shape_cast %11 : vector<8xf32> to vector<8x1xf32>
    %13 = vector.broadcast %12 : vector<8x1xf32> to vector<8x8xf32>
    %14 = arith.divf %10, %13 : vector<8x8xf32>
    %c0_6 = arith.constant 0 : index
    %c0_7 = arith.constant 0 : index
    %15 = vector.load %arg4[%c0_6, %c0_7] : memref<8x8xf32, #tpu.memory_space<vmem>>, vector<8x8xf32>
    tpu.vector_store %arg4[%c0_6, %c0_7], %14 {strides = array<i32>} : memref<8x8xf32, #tpu.memory_space<vmem>>, vector<8x8xf32>,
    %16 = vector.shape_cast %14 : vector<8x8xf32> to vector<8x8x1xf32>
    %17 = vector.broadcast %16 : vector<8x8x1xf32> to vector<8x8x494xf32>
    %18 = arith.mulf %17, %0 : vector<8x8x494xf32>
    %cst_8 = arith.constant dense<0.000000e+00> : vector<8x494xf32>
    %19 = vector.multi_reduction <add>, %18, %cst_8 [1] : vector<8x8x494xf32> to vector<8x494xf32>
    %c0_9 = arith.constant 0 : index
    %c0_10 = arith.constant 0 : index
    %20 = vector.load %arg3[%c0_9, %c0_10] : memref<8x494xf32, #tpu.memory_space<vmem>>, vector<8x494xf32>
    tpu.vector_store %arg3[%c0_9, %c0_10], %19 {strides = array<i32>} : memref<8x494xf32, #tpu.memory_space<vmem>>, vector<8x494xf32>,
    return
  }
  func.func @transform_0(%arg0: i32) -> (i32, i32, i32) {
    %c0_i32 = arith.constant 0 : i32
    %c0_i32_0 = arith.constant 0 : i32
    %c0_i32_1 = arith.constant 0 : i32
    return %arg0, %c0_i32, %c0_i32_0 : i32, i32, i32
  }
  func.func @transform_1(%arg0: i32) -> (i32, i32) {
    %c0_i32 = arith.constant 0 : i32
    %c0_i32_0 = arith.constant 0 : i32
    %c0_i32_1 = arith.constant 0 : i32
    return %c0_i32, %c0_i32_0 : i32, i32
  }
  func.func @transform_2(%arg0: i32) -> (i32, i32) {
    %c0_i32 = arith.constant 0 : i32
    %c0_i32_0 = arith.constant 0 : i32
    return %arg0, %c0_i32 : i32, i32
  }
  func.func @transform_3(%arg0: i32) -> (i32, i32) {
    %c0_i32 = arith.constant 0 : i32
    %c0_i32_0 = arith.constant 0 : i32
    return %arg0, %c0_i32 : i32, i32
  }
}

</mosaic_0001>

<llo_original>
// kernel: tpu_custom_call.1
$region0: #{tpu_custom_call.1}
  #allocation0 [shape = 'u32[]', space=smem, size = 0x4, offset = 0x4, fixed_abs, tag = 'smem constant byte address 0x4 - core index']
  #allocation1 [shape = 'u32[72,128]{1,0:T(1,128)}', space=vmem, size = 0x9000, scoped, tag = 'internal scratch']
  %s0 = inlined_call_operand.hbm [shape: f32[20,8,494], index: 0, kind: input, shape index: {}]
  %s1 = inlined_call_operand.hbm [shape: f32[1,494], index: 1, kind: input, shape index: {}]
  %s2 = inlined_call_operand.hbm [shape: f32[20,494], index: 2, kind: output, shape index: {0}]
  %s3 = inlined_call_operand.vmem [shape: f32[20,8], index: 3, kind: output, shape index: {1}]
  %4 = xla_tuple %s2, %s3
  %s5 = sld [smem:[#allocation0]]
  $region57: #{tpu_custom_call.1} parent=0
    _
  %s7 = ssub.s32 1, %s5
  %s8 = scalar_select 0, %s7, %s5
  $region1: #{tpu_custom_call.1} parent=0
    #allocation2 [shape = 'u8[262144]{0}', space=vmem, size = 0x40000, scoped, tag = 'input window, operand 0']
    #allocation3 [shape = 's32[2]{0}', space=sflag, size = 0x8, scoped, tag = 'scoped memory for tpu_custom_call.1']
    #allocation4 [shape = 's32[2]{0}', space=sflag, size = 0x8, scoped, tag = 'scoped memory for tpu_custom_call.1']
    #allocation5 [shape = 'u8[2048]{0}', space=vmem, size = 0x800, scoped, tag = 'input window, operand 1, single buffered']
    #allocation6 [shape = 's32[1]{0}', space=sflag, size = 0x4, scoped, tag = 'scoped memory for tpu_custom_call.1']
    #allocation7 [shape = 'u8[32768]{0}', space=vmem, size = 0x8000, scoped, tag = 'output window, operand 0']
    %9 = vsyncpa [#allocation3], 0
    %s10 = scalar_lea.sflag [#allocation3], 1
    %11 = vsyncpa %s10, 0
    %12 = vsyncpa [#allocation6], 0
    %13 = vsyncpa [#allocation4], 0
    %s14 = scalar_lea.sflag [#allocation4], 1
    %15 = vsyncpa %s14, 0
    loop: start=0, step=1, limit=5
    $region2: #{tpu_custom_call.1} parent=1 // loop_pre_header
      _
    $region3: #{tpu_custom_call.1} parent=1 // loop_header
      %s17 = sphi 0, %s21
      %p18 = scmp.ge.s32.totalorder %s17, 5
      %s27 = sphi 0, %s29
      %s30 = sphi 0, %s27
      %s31 = sphi 0, %s30
      %s47 = sphi 0, %s31
      %s51 = sphi 0, %s51
      %s53 = sphi 0, %s51
      %s54 = sphi 0, %s53
      %s68 = sphi 0, %s54
      %s74 = sphi 0, %s76
      %s77 = sphi 0, %s74
      %s78 = sphi 0, %s77
      %s94 = sphi 0, %s78
      %s100 = sphi 0, %s102
      %s103 = sphi 0, %s100
      %s104 = sphi 0, %s103
      %s120 = sphi 0, %s104
    $region4: #{tpu_custom_call.1} parent=1 // loop_header_branch
      %20 = sbr.rel (%p18) target = $region8
    $region5: #{tpu_custom_call.1} parent=1 // loop_body
      %s22 = ssub.s32 %s17, 1
      %s23 = ssub.s32 %s17, 2
      %s24 = sadd.s32 %s17, 1
      %s25 = ssub.s32 %s17, %s24
      %p26 = scmp.eq.s32.totalorder %s25, 0
      %s28 = sadd.s32 %s27, 1
      %s29 = scalar_select %p26, %s27, %s28
      %p32 = pneg %p26
      %p33 = scmp.eq.s32.totalorder %s17, 2
      %p34 = por %p32, %p33
      %p35 = scmp.ne.s32.totalorder %s27, %s30
      %p36 = scmp.eq.s32.totalorder %s17, 0
      %p37 = por %p35, %p36
      %p38 = scmp.ne.s32.totalorder %s27, %s30
      %p39 = scmp.eq.s32.totalorder %s22, 2
      %p40 = por %p38, %p39
      %p41 = scmp.ne.s32.totalorder %s30, %s31
      %p42 = scmp.eq.s32.totalorder %s22, 0
      %p43 = por %p41, %p42
      %p44 = scmp.ne.s32.totalorder %s30, %s31
      %p45 = scmp.eq.s32.totalorder %s23, 2
      %p46 = por %p44, %p45
      %p48 = scmp.ne.s32.totalorder %s31, %s47
      %p49 = scmp.eq.s32.totalorder %s23, 0
      %p50 = por %p48, %p49
      %s52 = sadd.s32 %s51, 1
      %p55 = scmp.eq.s32.totalorder %s17, 2
      %p56 = scmp.ne.s32.totalorder %s51, %s53
      %p57 = scmp.eq.s32.totalorder %s17, 0
      %p58 = por %p56, %p57
      %p59 = scmp.ne.s32.totalorder %s51, %s53
      %p60 = scmp.eq.s32.totalorder %s22, 2
      %p61 = por %p59, %p60
      %p62 = scmp.ne.s32.totalorder %s53, %s54
      %p63 = scmp.eq.s32.totalorder %s22, 0
      %p64 = por %p62, %p63
      %p65 = scmp.ne.s32.totalorder %s53, %s54
      %p66 = scmp.eq.s32.totalorder %s23, 2
      %p67 = por %p65, %p66
      %p69 = scmp.ne.s32.totalorder %s54, %s68
      %p70 = scmp.eq.s32.totalorder %s23, 0
      %p71 = por %p69, %p70
      %s72 = ssub.s32 %s17, %s24
      %p73 = scmp.eq.s32.totalorder %s72, 0
      %s75 = sadd.s32 %s74, 1
      %s76 = scalar_select %p73, %s74, %s75
      %p79 = pneg %p73
      %p80 = scmp.eq.s32.totalorder %s17, 2
      %p81 = por %p79, %p80
      %p82 = scmp.ne.s32.totalorder %s74, %s77
      %p83 = scmp.eq.s32.totalorder %s17, 0
      %p84 = por %p82, %p83
      %p85 = scmp.ne.s32.totalorder %s74, %s77
      %p86 = scmp.eq.s32.totalorder %s22, 2
      %p87 = por %p85, %p86
      %p88 = scmp.ne.s32.totalorder %s77, %s78
      %p89 = scmp.eq.s32.totalorder %s22, 0
      %p90 = por %p88, %p89
      %p91 = scmp.ne.s32.totalorder %s77, %s78
      %p92 = scmp.eq.s32.totalorder %s23, 2
      %p93 = por %p91, %p92
      %p95 = scmp.ne.s32.totalorder %s78, %s94
      %p96 = scmp.eq.s32.totalorder %s23, 0
      %p97 = por %p95, %p96
      %s98 = ssub.s32 %s17, %s24
      %p99 = scmp.eq.s32.totalorder %s98, 0
      %s101 = sadd.s32 %s100, 1
      %s102 = scalar_select %p99, %s100, %s101
      %p105 = pneg %p99
      %p106 = scmp.eq.s32.totalorder %s17, 2
      %p107 = por %p105, %p106
      %p108 = scmp.ne.s32.totalorder %s100, %s103
      %p109 = scmp.eq.s32.totalorder %s17, 0
      %p110 = por %p108, %p109
      %p111 = scmp.ne.s32.totalorder %s100, %s103
      %p112 = scmp.eq.s32.totalorder %s22, 2
      %p113 = por %p111, %p112
      %p114 = scmp.ne.s32.totalorder %s103, %s104
      %p115 = scmp.eq.s32.totalorder %s22, 0
      %p116 = por %p114, %p115
      %p117 = scmp.ne.s32.totalorder %s103, %s104
      %p118 = scmp.eq.s32.totalorder %s23, 2
      %p119 = por %p117, %p118
      %p121 = scmp.ne.s32.totalorder %s104, %s120
      %p122 = scmp.eq.s32.totalorder %s23, 0
      %p123 = por %p121, %p122
      %p124 = scmp.le.s32.totalorder 1, %s17
      %p125 = scmp.lt.s32.totalorder %s17, 4
      %p126 = pnand %p124, %p125
      %p127 = pneg %p126
      // Predicated region
      $region9: #{tpu_custom_call.1} parent=5 // pred_check
        _
      $region10: #{tpu_custom_call.1} parent=5 // pred_check_branch
        %129 = sbr.rel (%p126) target = $region12
      $region11: #{tpu_custom_call.1} parent=5 // pred_region
        %s130 = ssub.s32 %s17, 1
        // Predicated region
        $region13: #{tpu_custom_call.1} parent=11 // pred_check
          %p131 = pneg %p64
        $region14: #{tpu_custom_call.1} parent=11 // pred_check_branch
          %133 = sbr.rel (%p131) target = $region16
        $region15: #{tpu_custom_call.1} parent=11 // pred_region
          %135 = vsyncadd [#allocation6], 0
          %s137 = sshll.u32 %s1, 4
          %s138 = int_to_ptr.hbm [resolvable:$true] %s137
          %s139 = sshll.u32 [#allocation5], 4
          %s140 = int_to_ptr.vmem [resolvable:$true] %s139
          %142 = dma.hbm_to_vmem [thread:$0]  %s138, 64, %s140, [#allocation6]
        $region16: #{tpu_custom_call.1} parent=11 // pred_fallthru
          _
      $region12: #{tpu_custom_call.1} parent=5 // pred_fallthru
        _
      %p143 = scmp.lt.s32.totalorder %s17, 3
      // Predicated region
      $region17: #{tpu_custom_call.1} parent=5 // pred_check
        %p144 = pneg %p143
      $region18: #{tpu_custom_call.1} parent=5 // pred_check_branch
        %146 = sbr.rel (%p144) target = $region20
      $region19: #{tpu_custom_call.1} parent=5 // pred_region
        // Predicated region
        $region21: #{tpu_custom_call.1} parent=19 // pred_check
          %p147 = pneg %p37
        $region22: #{tpu_custom_call.1} parent=19 // pred_check_branch
          %149 = sbr.rel (%p147) target = $region24
        $region23: #{tpu_custom_call.1} parent=19 // pred_region
          %s150 = sand.u32 %s27, 1
          %s151 = scalar_lea.sflag [#allocation3], %s150
          %s152 = sand.u32 %s27, 1
          %s153 = smul.addr %s152, 256
          %s154 = scalar_lea.vmem [#allocation2], %s153
          %s155 = smul.u32 8, %s17
          %s156 = ssub.s32 20, %s155
          %p157 = scmp.lt.s32.totalorder %s156, 8
          %s158 = scalar_select %p157, %s156, 8
          %s159 = smul.u32 8, %s158
          %s160 = smul.u32 %s159, 4
          %s161 = ssub.s32 256, %s160
          %s162 = sshll.u32 %s161, 4
          %163 = vsyncadd %s151, %s162
          %p164 = scmp.ne.s32.totalorder 0, %s160
          %s165 = smul.addr %s155, 4
          %s166 = smul.addr %s165, 8
          %s167 = scalar_lea.hbm %s0, %s166
          %s168 = smul.u32 32, %s158
          %s169 = sshll.u32 %s167, 4
          %s170 = int_to_ptr.hbm [resolvable:$true] %s169
          %s171 = sshll.u32 %s154, 4
          %s172 = int_to_ptr.vmem [resolvable:$true] %s171
          %s173 = sshll.u32 %s168, 4
          %177 = dma.hbm_to_vmem [thread:$0]  (%p164), %s170, %s173, %s172, %s151, 512, 512, 32
        $region24: #{tpu_custom_call.1} parent=19 // pred_fallthru
          _
      $region20: #{tpu_custom_call.1} parent=5 // pred_fallthru
        _
      %p178 = scmp.le.s32.totalorder 1, %s17
      %p179 = scmp.lt.s32.totalorder %s17, 4
      %p180 = pnand %p178, %p179
      %p181 = pneg %p180
      // Predicated region
      $region25: #{tpu_custom_call.1} parent=5 // pred_check
        _
      $region26: #{tpu_custom_call.1} parent=5 // pred_check_branch
        %183 = sbr.rel (%p180) target = $region28
      $region27: #{tpu_custom_call.1} parent=5 // pred_region
        %s184 = ssub.s32 %s17, 1
        %s185 = sand.u32 %s30, 1
        %s186 = scalar_lea.sflag [#allocation3], %s185
        %s187 = sand.u32 %s30, 1
        %s188 = smul.addr %s187, 256
        %s189 = scalar_lea.vmem [#allocation2], %s188
        // Predicated region
        $region29: #{tpu_custom_call.1} parent=27 // pred_check
          %p190 = pneg %p43
        $region30: #{tpu_custom_call.1} parent=27 // pred_check_branch
          %192 = sbr.rel (%p190) target = $region32
        $region31: #{tpu_custom_call.1} parent=27 // pred_region
          %194 = dma.done %s186, 4096
        $region32: #{tpu_custom_call.1} parent=27 // pred_fallthru
          _
        // Predicated region
        $region33: #{tpu_custom_call.1} parent=27 // pred_check
          %p195 = pneg %p64
        $region34: #{tpu_custom_call.1} parent=27 // pred_check_branch
          %197 = sbr.rel (%p195) target = $region36
        $region35: #{tpu_custom_call.1} parent=27 // pred_region
          %199 = dma.done [#allocation6], 64
        $region36: #{tpu_custom_call.1} parent=27 // pred_fallthru
          _
        %s200 = sand.u32 %s30, 1
        %s201 = scalar_lea.sflag [#allocation3], %s200
        %s202 = sand.u32 %s30, 1
        %s203 = smul.addr %s202, 256
        %s204 = scalar_lea.vmem [#allocation2], %s203
        %p205 = pneg %p43
        %p206 = pneg %p40
        %p207 = pneg %p64
        %p208 = pneg %p61
        %p209 = pneg %p90
        %p210 = pneg %p87
        %s211 = sand.u32 %s77, 1
        %s212 = scalar_lea.sflag [#allocation4], %s211
        %s213 = sand.u32 %s77, 1
        %s214 = smul.addr %s213, 32
        %s215 = scalar_lea.vmem [#allocation7], %s214
        %p216 = pneg %p116
        %p217 = pneg %p113
        %p218 = scmp.lt.s32.totalorder %s22, 2
        %s219 = scalar_select %p218, %s22, 2
        %s220 = smul.addr %s219, 8
        %s221 = scalar_lea.vmem %s3, %s220
        %s222 = smul.u32 8, %s22
        %s223 = ssub.s32 20, %s222
        %p224 = scmp.lt.s32.totalorder %s223, 8
        %s225 = scalar_select %p224, %s223, 8
        %s226 = smul.u32 8, %s225
        %s227 = smul.u32 %s226, 4
        %p228 = scmp.lt.s32.totalorder %s22, 2
        %s229 = scalar_select %p228, %s22, 2
        %s230 = smul.addr %s229, 8
        %s231 = scalar_lea.vmem %s3, %s230
        %v232 = vld [vmem:[%s189] sm:$0xff]
        %v233 = vld [vmem:[%s189 + $0x8] sm:$0xff]
        %v234 = vld [vmem:[%s189 + $0x10] sm:$0xff]
        %v235 = vld [vmem:[%s189 + $0x18] sm:$0xff]
        %v236 = vld [vmem:[%s189 + $0x20] sm:$0xff]
        %v237 = vld [vmem:[%s189 + $0x28] sm:$0xff]
        %v238 = vld [vmem:[%s189 + $0x30] sm:$0xff]
        %v239 = vld [vmem:[%s189 + $0x38] sm:$0xff]
        %v240 = vld [vmem:[%s189 + $0x40] sm:$0xff]
        %v241 = vld [vmem:[%s189 + $0x48] sm:$0xff]
        %v242 = vld [vmem:[%s189 + $0x50] sm:$0xff]
        %v243 = vld [vmem:[%s189 + $0x58] sm:$0xff]
        %v244 = vld [vmem:[%s189 + $0x60] sm:$0xff]
        %v245 = vld [vmem:[%s189 + $0x68] sm:$0xff]
        %v246 = vld [vmem:[%s189 + $0x70] sm:$0xff]
        %v247 = vld [vmem:[%s189 + $0x78] sm:$0xff]
        %v248 = vld [vmem:[%s189 + $0x80] sm:$0xff]
        %v249 = vld [vmem:[%s189 + $0x88] sm:$0xff]
        %v250 = vld [vmem:[%s189 + $0x90] sm:$0xff]
        %v251 = vld [vmem:[%s189 + $0x98] sm:$0xff]
        %v252 = vld [vmem:[%s189 + $0xa0] sm:$0xff]
        %v253 = vld [vmem:[%s189 + $0xa8] sm:$0xff]
        %v254 = vld [vmem:[%s189 + $0xb0] sm:$0xff]
        %v255 = vld [vmem:[%s189 + $0xb8] sm:$0xff]
        %v256 = vld [vmem:[%s189 + $0xc0] sm:$0xff]
        %v257 = vld [vmem:[%s189 + $0xc8] sm:$0xff]
        %v258 = vld [vmem:[%s189 + $0xd0] sm:$0xff]
        %v259 = vld [vmem:[%s189 + $0xd8] sm:$0xff]
        %v260 = vld [vmem:[%s189 + $0xe0] sm:$0xff]
        %v261 = vld [vmem:[%s189 + $0xe8] sm:$0xff]
        %v262 = vld [vmem:[%s189 + $0xf0] sm:$0xff]
        %v263 = vld [vmem:[%s189 + $0xf8] sm:$0xff]
        %v264 = vld [vmem:[#allocation5] sm:$0xf]
        %v266 = vperm.slane %v264, 0
        %v267 = vperm.slane %v264, 1
        %v268 = vperm.slane %v264, 2
        %v269 = vperm.slane %v264, 3
        %v274 = vmul.f32 %v232, %v266
        %v275 = vmul.f32 %v233, %v267
        %v276 = vmul.f32 %v234, %v268
        %v277 = vmul.f32 %v235, %v269
        %v278 = vmul.f32 %v236, %v266
        %v279 = vmul.f32 %v237, %v267
        %v280 = vmul.f32 %v238, %v268
        %v281 = vmul.f32 %v239, %v269
        %v282 = vmul.f32 %v240, %v266
        %v283 = vmul.f32 %v241, %v267
        %v284 = vmul.f32 %v242, %v268
        %v285 = vmul.f32 %v243, %v269
        %v286 = vmul.f32 %v244, %v266
        %v287 = vmul.f32 %v245, %v267
        %v288 = vmul.f32 %v246, %v268
        %v289 = vmul.f32 %v247, %v269
        %v290 = vmul.f32 %v248, %v266
        %v291 = vmul.f32 %v249, %v267
        %v292 = vmul.f32 %v250, %v268
        %v293 = vmul.f32 %v251, %v269
        %v294 = vmul.f32 %v252, %v266
        %v295 = vmul.f32 %v253, %v267
        %v296 = vmul.f32 %v254, %v268
        %v297 = vmul.f32 %v255, %v269
        %v298 = vmul.f32 %v256, %v266
        %v299 = vmul.f32 %v257, %v267
        %v300 = vmul.f32 %v258, %v268
        %v301 = vmul.f32 %v259, %v269
        %v302 = vmul.f32 %v260, %v266
        %v303 = vmul.f32 %v261, %v267
        %v304 = vmul.f32 %v262, %v268
        %v305 = vmul.f32 %v263, %v269
        %v306 = vadd.f32 %v274, %v275
        %v307 = vadd.f32 %v306, %v276
        %vm308 = vcmask 900096
        %v309 = vsel %vm308, %v277, 0.0
        %v310 = vadd.f32 %v307, %v309
        %311 = vadd.xlane.f32.xlu0 %v310
        %v312 = vpop.xlane.xlu0 %311
        %v313 = vadd.f32 %v278, %v279
        %v314 = vadd.f32 %v313, %v280
        %v315 = vsel %vm308, %v281, 0.0
        %v316 = vadd.f32 %v314, %v315
        %317 = vadd.xlane.f32.xlu0 %v316
        %v318 = vpop.xlane.xlu0 %317
        %v319 = vadd.f32 %v282, %v283
        %v320 = vadd.f32 %v319, %v284
        %v321 = vsel %vm308, %v285, 0.0
        %v322 = vadd.f32 %v320, %v321
        %323 = vadd.xlane.f32.xlu0 %v322
        %v324 = vpop.xlane.xlu0 %323
        %v325 = vadd.f32 %v286, %v287
        %v326 = vadd.f32 %v325, %v288
        %v327 = vsel %vm308, %v289, 0.0
        %v328 = vadd.f32 %v326, %v327
        %329 = vadd.xlane.f32.xlu0 %v328
        %v330 = vpop.xlane.xlu0 %329
        %v331 = vadd.f32 %v290, %v291
        %v332 = vadd.f32 %v331, %v292
        %v333 = vsel %vm308, %v293, 0.0
        %v334 = vadd.f32 %v332, %v333
        %335 = vadd.xlane.f32.xlu0 %v334
        %v336 = vpop.xlane.xlu0 %335
        %v337 = vadd.f32 %v294, %v295
        %v338 = vadd.f32 %v337, %v296
        %v339 = vsel %vm308, %v297, 0.0
        %v340 = vadd.f32 %v338, %v339
        %341 = vadd.xlane.f32.xlu0 %v340
        %v342 = vpop.xlane.xlu0 %341
        %v343 = vadd.f32 %v298, %v299
        %v344 = vadd.f32 %v343, %v300
        %v345 = vsel %vm308, %v301, 0.0
        %v346 = vadd.f32 %v344, %v345
        %347 = vadd.xlane.f32.xlu0 %v346
        %v348 = vpop.xlane.xlu0 %347
        %v349 = vadd.f32 %v302, %v303
        %v350 = vadd.f32 %v349, %v304
        %v351 = vsel %vm308, %v305, 0.0
        %v352 = vadd.f32 %v350, %v351
        %353 = vadd.xlane.f32.xlu0 %v352
        %v354 = vpop.xlane.xlu0 %353
        %v363 = vlaneseq
        %v364 = vand.u32 %v363, 127
        %v365 = vperm.slane %v312, %v364
        %v366 = vperm.slane %v318, %v364
        %v367 = vperm.slane %v324, %v364
        %v368 = vperm.slane %v330, %v364
        %v369 = vperm.slane %v336, %v364
        %v370 = vperm.slane %v342, %v364
        %v371 = vperm.slane %v348, %v364
        %v372 = vperm.slane %v354, %v364
        %vm373 = vcmask 1041409
        %v374 = vsel %vm373, %v366, %v365
        %vm375 = vcmask 1042434
        %v376 = vsel %vm375, %v367, %v374
        %vm377 = vcmask 1043459
        %v378 = vsel %vm377, %v368, %v376
        %vm379 = vcmask 1044484
        %v380 = vsel %vm379, %v369, %v378
        %vm381 = vcmask 1045509
        %v382 = vsel %vm381, %v370, %v380
        %vm383 = vcmask 1046534
        %v384 = vsel %vm383, %v371, %v382
        %vm385 = vcmask 1047559
        %v386 = vsel %vm385, %v372, %v384
        %vm388 = vcmask 64512
        %v389 = vsel %vm388, %v386, -inf
        %390 = vmax.xlane.f32.xlu0 %v389
        %v391 = vpop.xlane.xlu0 %390
        %v393 = vperm.slane %v391, 0
        %v394 = vperm.slane %v391, 1
        %v395 = vperm.slane %v391, 2
        %v396 = vperm.slane %v391, 3
        %v397 = vperm.slane %v391, 4
        %v398 = vperm.slane %v391, 5
        %v399 = vperm.slane %v391, 6
        %v400 = vperm.slane %v391, 7
        %v409 = vsub.f32 %v312, %v393
        %v410 = vsub.f32 %v318, %v394
        %v411 = vsub.f32 %v324, %v395
        %v412 = vsub.f32 %v330, %v396
        %v413 = vsub.f32 %v336, %v397
        %v414 = vsub.f32 %v342, %v398
        %v415 = vsub.f32 %v348, %v399
        %v416 = vsub.f32 %v354, %v400
        %v417 = vmul.f32 %v409, 1.442695
        %v418 = vpow.pop %v417
        %v419 = vmul.f32 %v410, 1.442695
        %v420 = vpow.pop %v419
        %v421 = vmul.f32 %v411, 1.442695
        %v422 = vpow.pop %v421
        %v423 = vmul.f32 %v412, 1.442695
        %v424 = vpow.pop %v423
        %v425 = vmul.f32 %v413, 1.442695
        %v426 = vpow.pop %v425
        %v427 = vmul.f32 %v414, 1.442695
        %v428 = vpow.pop %v427
        %v429 = vmul.f32 %v415, 1.442695
        %v430 = vpow.pop %v429
        %v431 = vmul.f32 %v416, 1.442695
        %v432 = vpow.pop %v431
        %441 = vset.pattern.permute.xlu0 0
        %442 = vperm.xlu0 %441, %v418
        %v443 = vpop.permute.xlu0 %442
        %444 = vset.pattern.permute.xlu0 0
        %445 = vperm.xlu0 %444, %v420
        %v446 = vpop.permute.xlu0 %445
        %447 = vset.pattern.permute.xlu0 0
        %448 = vperm.xlu0 %447, %v422
        %v449 = vpop.permute.xlu0 %448
        %450 = vset.pattern.permute.xlu0 0
        %451 = vperm.xlu0 %450, %v424
        %v452 = vpop.permute.xlu0 %451
        %453 = vset.pattern.permute.xlu0 0
        %454 = vperm.xlu0 %453, %v426
        %v455 = vpop.permute.xlu0 %454
        %456 = vset.pattern.permute.xlu0 0
        %457 = vperm.xlu0 %456, %v428
        %v458 = vpop.permute.xlu0 %457
        %459 = vset.pattern.permute.xlu0 0
        %460 = vperm.xlu0 %459, %v430
        %v461 = vpop.permute.xlu0 %460
        %462 = vset.pattern.permute.xlu0 0
        %463 = vperm.xlu0 %462, %v432
        %v464 = vpop.permute.xlu0 %463
        %v465 = vperm.slane %v443, %v364
        %v466 = vperm.slane %v446, %v364
        %v467 = vperm.slane %v449, %v364
        %v468 = vperm.slane %v452, %v364
        %v469 = vperm.slane %v455, %v364
        %v470 = vperm.slane %v458, %v364
        %v471 = vperm.slane %v461, %v364
        %v472 = vperm.slane %v464, %v364
        %v473 = vsel %vm373, %v466, %v465
        %v474 = vsel %vm375, %v467, %v473
        %v475 = vsel %vm377, %v468, %v474
        %v476 = vsel %vm379, %v469, %v475
        %v477 = vsel %vm381, %v470, %v476
        %v478 = vsel %vm383, %v471, %v477
        %v479 = vsel %vm385, %v472, %v478
        %v481 = vsel %vm388, %v479, 0.0
        %482 = vadd.xlane.f32.xlu0 %v481
        %v483 = vpop.xlane.xlu0 %482
        %v485 = vperm.slane %v483, 0
        %v486 = vperm.slane %v483, 1
        %v487 = vperm.slane %v483, 2
        %v488 = vperm.slane %v483, 3
        %v489 = vperm.slane %v483, 4
        %v490 = vperm.slane %v483, 5
        %v491 = vperm.slane %v483, 6
        %v492 = vperm.slane %v483, 7
        %v501 = vrcp.pop %v485
        %v502 = vmul.f32 %v485, %v501
        %v503 = vsub.f32 1.0, %v502
        %v504 = vmul.f32 %v501, %v503
        %v505 = vadd.f32 %v501, %v504
        %vm506 = vweird.f32 %v485
        %vm507 = vweird.f32 %v501
        %vm508 = vmor %vm506, %vm507
        %v509 = vsel %vm508, %v501, %v505
        %v510 = vand.u32 2147483647, %v485
        %vm511 = vcmp.eq.f32.partialorder %v510, 8.507059e+37
        %v512 = vand.u32 %v485, 2147483648
        %v513 = vor.u32 1.1754944e-38, %v512
        %v514 = vsel %vm511, %v513, %v509
        %v515 = vmul.f32 %v418, %v514
        %v516 = vrcp.pop %v486
        %v517 = vmul.f32 %v486, %v516
        %v518 = vsub.f32 1.0, %v517
        %v519 = vmul.f32 %v516, %v518
        %v520 = vadd.f32 %v516, %v519
        %vm521 = vweird.f32 %v486
        %vm522 = vweird.f32 %v516
        %vm523 = vmor %vm521, %vm522
        %v524 = vsel %vm523, %v516, %v520
        %v525 = vand.u32 2147483647, %v486
        %vm526 = vcmp.eq.f32.partialorder %v525, 8.507059e+37
        %v527 = vand.u32 %v486, 2147483648
        %v528 = vor.u32 1.1754944e-38, %v527
        %v529 = vsel %vm526, %v528, %v524
        %v530 = vmul.f32 %v420, %v529
        %v531 = vrcp.pop %v487
        %v532 = vmul.f32 %v487, %v531
        %v533 = vsub.f32 1.0, %v532
        %v534 = vmul.f32 %v531, %v533
        %v535 = vadd.f32 %v531, %v534
        %vm536 = vweird.f32 %v487
        %vm537 = vweird.f32 %v531
        %vm538 = vmor %vm536, %vm537
        %v539 = vsel %vm538, %v531, %v535
        %v540 = vand.u32 2147483647, %v487
        %vm541 = vcmp.eq.f32.partialorder %v540, 8.507059e+37
        %v542 = vand.u32 %v487, 2147483648
        %v543 = vor.u32 1.1754944e-38, %v542
        %v544 = vsel %vm541, %v543, %v539
        %v545 = vmul.f32 %v422, %v544
        %v546 = vrcp.pop %v488
        %v547 = vmul.f32 %v488, %v546
        %v548 = vsub.f32 1.0, %v547
        %v549 = vmul.f32 %v546, %v548
        %v550 = vadd.f32 %v546, %v549
        %vm551 = vweird.f32 %v488
        %vm552 = vweird.f32 %v546
        %vm553 = vmor %vm551, %vm552
        %v554 = vsel %vm553, %v546, %v550
        %v555 = vand.u32 2147483647, %v488
        %vm556 = vcmp.eq.f32.partialorder %v555, 8.507059e+37
        %v557 = vand.u32 %v488, 2147483648
        %v558 = vor.u32 1.1754944e-38, %v557
        %v559 = vsel %vm556, %v558, %v554
        %v560 = vmul.f32 %v424, %v559
        %v561 = vrcp.pop %v489
        %v562 = vmul.f32 %v489, %v561
        %v563 = vsub.f32 1.0, %v562
        %v564 = vmul.f32 %v561, %v563
        %v565 = vadd.f32 %v561, %v564
        %vm566 = vweird.f32 %v489
        %vm567 = vweird.f32 %v561
        %vm568 = vmor %vm566, %vm567
        %v569 = vsel %vm568, %v561, %v565
        %v570 = vand.u32 2147483647, %v489
        %vm571 = vcmp.eq.f32.partialorder %v570, 8.507059e+37
        %v572 = vand.u32 %v489, 2147483648
        %v573 = vor.u32 1.1754944e-38, %v572
        %v574 = vsel %vm571, %v573, %v569
        %v575 = vmul.f32 %v426, %v574
        %v576 = vrcp.pop %v490
        %v577 = vmul.f32 %v490, %v576
        %v578 = vsub.f32 1.0, %v577
        %v579 = vmul.f32 %v576, %v578
        %v580 = vadd.f32 %v576, %v579
        %vm581 = vweird.f32 %v490
        %vm582 = vweird.f32 %v576
        %vm583 = vmor %vm581, %vm582
        %v584 = vsel %vm583, %v576, %v580
        %v585 = vand.u32 2147483647, %v490
        %vm586 = vcmp.eq.f32.partialorder %v585, 8.507059e+37
        %v587 = vand.u32 %v490, 2147483648
        %v588 = vor.u32 1.1754944e-38, %v587
        %v589 = vsel %vm586, %v588, %v584
        %v590 = vmul.f32 %v428, %v589
        %v591 = vrcp.pop %v491
        %v592 = vmul.f32 %v491, %v591
        %v593 = vsub.f32 1.0, %v592
        %v594 = vmul.f32 %v591, %v593
        %v595 = vadd.f32 %v591, %v594
        %vm596 = vweird.f32 %v491
        %vm597 = vweird.f32 %v591
        %vm598 = vmor %vm596, %vm597
        %v599 = vsel %vm598, %v591, %v595
        %v600 = vand.u32 2147483647, %v491
        %vm601 = vcmp.eq.f32.partialorder %v600, 8.507059e+37
        %v602 = vand.u32 %v491, 2147483648
        %v603 = vor.u32 1.1754944e-38, %v602
        %v604 = vsel %vm601, %v603, %v599
        %v605 = vmul.f32 %v430, %v604
        %v606 = vrcp.pop %v492
        %v607 = vmul.f32 %v492, %v606
        %v608 = vsub.f32 1.0, %v607
        %v609 = vmul.f32 %v606, %v608
        %v610 = vadd.f32 %v606, %v609
        %vm611 = vweird.f32 %v492
        %vm612 = vweird.f32 %v606
        %vm613 = vmor %vm611, %vm612
        %v614 = vsel %vm613, %v606, %v610
        %v615 = vand.u32 2147483647, %v492
        %vm616 = vcmp.eq.f32.partialorder %v615, 8.507059e+37
        %v617 = vand.u32 %v492, 2147483648
        %v618 = vor.u32 1.1754944e-38, %v617
        %v619 = vsel %vm616, %v618, %v614
        %v620 = vmul.f32 %v432, %v619
        %629 = vset.pattern.permute.xlu0 0
        %630 = vperm.xlu0 %629, %v515
        %v631 = vpop.permute.xlu0 %630
        %632 = vset.pattern.permute.xlu0 0
        %633 = vperm.xlu0 %632, %v530
        %v634 = vpop.permute.xlu0 %633
        %635 = vset.pattern.permute.xlu0 0
        %636 = vperm.xlu0 %635, %v545
        %v637 = vpop.permute.xlu0 %636
        %638 = vset.pattern.permute.xlu0 0
        %639 = vperm.xlu0 %638, %v560
        %v640 = vpop.permute.xlu0 %639
        %641 = vset.pattern.permute.xlu0 0
        %642 = vperm.xlu0 %641, %v575
        %v643 = vpop.permute.xlu0 %642
        %644 = vset.pattern.permute.xlu0 0
        %645 = vperm.xlu0 %644, %v590
        %v646 = vpop.permute.xlu0 %645
        %647 = vset.pattern.permute.xlu0 0
        %648 = vperm.xlu0 %647, %v605
        %v649 = vpop.permute.xlu0 %648
        %650 = vset.pattern.permute.xlu0 0
        %651 = vperm.xlu0 %650, %v620
        %v652 = vpop.permute.xlu0 %651
        %v653 = vperm.slane %v631, %v364
        %v654 = vperm.slane %v634, %v364
        %v655 = vperm.slane %v637, %v364
        %v656 = vperm.slane %v640, %v364
        %v657 = vperm.slane %v643, %v364
        %v658 = vperm.slane %v646, %v364
        %v659 = vperm.slane %v649, %v364
        %v660 = vperm.slane %v652, %v364
        %v661 = vsel %vm373, %v654, %v653
        %v662 = vsel %vm375, %v655, %v661
        %v663 = vsel %vm377, %v656, %v662
        %v664 = vsel %vm379, %v657, %v663
        %v665 = vsel %vm381, %v658, %v664
        %v666 = vsel %vm383, %v659, %v665
        %v667 = vsel %vm385, %v660, %v666
        %669 = vst.msk [vmem:[%s231] sm:$0xff] %vm388, %v667
        %v678 = vmul.f32 %v631, %v232
        %v679 = vmul.f32 %v631, %v233
        %v680 = vmul.f32 %v631, %v234
        %v681 = vmul.f32 %v631, %v235
        %v682 = vmul.f32 %v634, %v236
        %v683 = vmul.f32 %v634, %v237
        %v684 = vmul.f32 %v634, %v238
        %v685 = vmul.f32 %v634, %v239
        %v686 = vmul.f32 %v637, %v240
        %v687 = vmul.f32 %v637, %v241
        %v688 = vmul.f32 %v637, %v242
        %v689 = vmul.f32 %v637, %v243
        %v690 = vmul.f32 %v640, %v244
        %v691 = vmul.f32 %v640, %v245
        %v692 = vmul.f32 %v640, %v246
        %v693 = vmul.f32 %v640, %v247
        %v694 = vmul.f32 %v643, %v248
        %v695 = vmul.f32 %v643, %v249
        %v696 = vmul.f32 %v643, %v250
        %v697 = vmul.f32 %v643, %v251
        %v698 = vmul.f32 %v646, %v252
        %v699 = vmul.f32 %v646, %v253
        %v700 = vmul.f32 %v646, %v254
        %v701 = vmul.f32 %v646, %v255
        %v702 = vmul.f32 %v649, %v256
        %v703 = vmul.f32 %v649, %v257
        %v704 = vmul.f32 %v649, %v258
        %v705 = vmul.f32 %v649, %v259
        %v706 = vmul.f32 %v652, %v260
        %v707 = vmul.f32 %v652, %v261
        %v708 = vmul.f32 %v652, %v262
        %v709 = vmul.f32 %v652, %v263
        %v710 = vrot.slane %v678, 4
        %v711 = vadd.f32 %v678, %v710
        %v712 = vrot.slane %v711, 2
        %v713 = vadd.f32 %v711, %v712
        %v714 = vrot.slane %v713, 1
        %v715 = vadd.f32 %v713, %v714
        %v716 = vrot.slane %v679, 4
        %v717 = vadd.f32 %v679, %v716
        %v718 = vrot.slane %v717, 2
        %v719 = vadd.f32 %v717, %v718
        %v720 = vrot.slane %v719, 1
        %v721 = vadd.f32 %v719, %v720
        %v722 = vrot.slane %v680, 4
        %v723 = vadd.f32 %v680, %v722
        %v724 = vrot.slane %v723, 2
        %v725 = vadd.f32 %v723, %v724
        %v726 = vrot.slane %v725, 1
        %v727 = vadd.f32 %v725, %v726
        %v728 = vsel %vm308, %v681, 0.0
        %v729 = vrot.slane %v728, 4
        %v730 = vadd.f32 %v728, %v729
        %v731 = vrot.slane %v730, 2
        %v732 = vadd.f32 %v730, %v731
        %v733 = vrot.slane %v732, 1
        %v734 = vadd.f32 %v732, %v733
        %v735 = vrot.slane %v682, 4
        %v736 = vadd.f32 %v682, %v735
        %v737 = vrot.slane %v736, 2
        %v738 = vadd.f32 %v736, %v737
        %v739 = vrot.slane %v738, 1
        %v740 = vadd.f32 %v738, %v739
        %v741 = vrot.slane %v683, 4
        %v742 = vadd.f32 %v683, %v741
        %v743 = vrot.slane %v742, 2
        %v744 = vadd.f32 %v742, %v743
        %v745 = vrot.slane %v744, 1
        %v746 = vadd.f32 %v744, %v745
        %v747 = vrot.slane %v684, 4
        %v748 = vadd.f32 %v684, %v747
        %v749 = vrot.slane %v748, 2
        %v750 = vadd.f32 %v748, %v749
        %v751 = vrot.slane %v750, 1
        %v752 = vadd.f32 %v750, %v751
        %v753 = vsel %vm308, %v685, 0.0
        %v754 = vrot.slane %v753, 4
        %v755 = vadd.f32 %v753, %v754
        %v756 = vrot.slane %v755, 2
        %v757 = vadd.f32 %v755, %v756
        %v758 = vrot.slane %v757, 1
        %v759 = vadd.f32 %v757, %v758
        %v760 = vrot.slane %v686, 4
        %v761 = vadd.f32 %v686, %v760
        %v762 = vrot.slane %v761, 2
        %v763 = vadd.f32 %v761, %v762
        %v764 = vrot.slane %v763, 1
        %v765 = vadd.f32 %v763, %v764
        %v766 = vrot.slane %v687, 4
        %v767 = vadd.f32 %v687, %v766
        %v768 = vrot.slane %v767, 2
        %v769 = vadd.f32 %v767, %v768
        %v770 = vrot.slane %v769, 1
        %v771 = vadd.f32 %v769, %v770
        %v772 = vrot.slane %v688, 4
        %v773 = vadd.f32 %v688, %v772
        %v774 = vrot.slane %v773, 2
        %v775 = vadd.f32 %v773, %v774
        %v776 = vrot.slane %v775, 1
        %v777 = vadd.f32 %v775, %v776
        %v778 = vsel %vm308, %v689, 0.0
        %v779 = vrot.slane %v778, 4
        %v780 = vadd.f32 %v778, %v779
        %v781 = vrot.slane %v780, 2
        %v782 = vadd.f32 %v780, %v781
        %v783 = vrot.slane %v782, 1
        %v784 = vadd.f32 %v782, %v783
        %v785 = vrot.slane %v690, 4
        %v786 = vadd.f32 %v690, %v785
        %v787 = vrot.slane %v786, 2
        %v788 = vadd.f32 %v786, %v787
        %v789 = vrot.slane %v788, 1
        %v790 = vadd.f32 %v788, %v789
        %v791 = vrot.slane %v691, 4
        %v792 = vadd.f32 %v691, %v791
        %v793 = vrot.slane %v792, 2
        %v794 = vadd.f32 %v792, %v793
        %v795 = vrot.slane %v794, 1
        %v796 = vadd.f32 %v794, %v795
        %v797 = vrot.slane %v692, 4
        %v798 = vadd.f32 %v692, %v797
        %v799 = vrot.slane %v798, 2
        %v800 = vadd.f32 %v798, %v799
        %v801 = vrot.slane %v800, 1
        %v802 = vadd.f32 %v800, %v801
        %v803 = vsel %vm308, %v693, 0.0
        %v804 = vrot.slane %v803, 4
        %v805 = vadd.f32 %v803, %v804
        %v806 = vrot.slane %v805, 2
        %v807 = vadd.f32 %v805, %v806
        %v808 = vrot.slane %v807, 1
        %v809 = vadd.f32 %v807, %v808
        %v810 = vrot.slane %v694, 4
        %v811 = vadd.f32 %v694, %v810
        %v812 = vrot.slane %v811, 2
        %v813 = vadd.f32 %v811, %v812
        %v814 = vrot.slane %v813, 1
        %v815 = vadd.f32 %v813, %v814
        %v816 = vrot.slane %v695, 4
        %v817 = vadd.f32 %v695, %v816
        %v818 = vrot.slane %v817, 2
        %v819 = vadd.f32 %v817, %v818
        %v820 = vrot.slane %v819, 1
        %v821 = vadd.f32 %v819, %v820
        %v822 = vrot.slane %v696, 4
        %v823 = vadd.f32 %v696, %v822
        %v824 = vrot.slane %v823, 2
        %v825 = vadd.f32 %v823, %v824
        %v826 = vrot.slane %v825, 1
        %v827 = vadd.f32 %v825, %v826
        %v828 = vsel %vm308, %v697, 0.0
        %v829 = vrot.slane %v828, 4
        %v830 = vadd.f32 %v828, %v829
        %v831 = vrot.slane %v830, 2
        %v832 = vadd.f32 %v830, %v831
        %v833 = vrot.slane %v832, 1
        %v834 = vadd.f32 %v832, %v833
        %v835 = vrot.slane %v698, 4
        %v836 = vadd.f32 %v698, %v835
        %v837 = vrot.slane %v836, 2
        %v838 = vadd.f32 %v836, %v837
        %v839 = vrot.slane %v838, 1
        %v840 = vadd.f32 %v838, %v839
        %v841 = vrot.slane %v699, 4
        %v842 = vadd.f32 %v699, %v841
        %v843 = vrot.slane %v842, 2
        %v844 = vadd.f32 %v842, %v843
        %v845 = vrot.slane %v844, 1
        %v846 = vadd.f32 %v844, %v845
        %v847 = vrot.slane %v700, 4
        %v848 = vadd.f32 %v700, %v847
        %v849 = vrot.slane %v848, 2
        %v850 = vadd.f32 %v848, %v849
        %v851 = vrot.slane %v850, 1
        %v852 = vadd.f32 %v850, %v851
        %v853 = vsel %vm308, %v701, 0.0
        %v854 = vrot.slane %v853, 4
        %v855 = vadd.f32 %v853, %v854
        %v856 = vrot.slane %v855, 2
        %v857 = vadd.f32 %v855, %v856
        %v858 = vrot.slane %v857, 1
        %v859 = vadd.f32 %v857, %v858
        %v860 = vrot.slane %v702, 4
        %v861 = vadd.f32 %v702, %v860
        %v862 = vrot.slane %v861, 2
        %v863 = vadd.f32 %v861, %v862
        %v864 = vrot.slane %v863, 1
        %v865 = vadd.f32 %v863, %v864
        %v866 = vrot.slane %v703, 4
        %v867 = vadd.f32 %v703, %v866
        %v868 = vrot.slane %v867, 2
        %v869 = vadd.f32 %v867, %v868
        %v870 = vrot.slane %v869, 1
        %v871 = vadd.f32 %v869, %v870
        %v872 = vrot.slane %v704, 4
        %v873 = vadd.f32 %v704, %v872
        %v874 = vrot.slane %v873, 2
        %v875 = vadd.f32 %v873, %v874
        %v876 = vrot.slane %v875, 1
        %v877 = vadd.f32 %v875, %v876
        %v878 = vsel %vm308, %v705, 0.0
        %v879 = vrot.slane %v878, 4
        %v880 = vadd.f32 %v878, %v879
        %v881 = vrot.slane %v880, 2
        %v882 = vadd.f32 %v880, %v881
        %v883 = vrot.slane %v882, 1
        %v884 = vadd.f32 %v882, %v883
        %v885 = vrot.slane %v706, 4
        %v886 = vadd.f32 %v706, %v885
        %v887 = vrot.slane %v886, 2
        %v888 = vadd.f32 %v886, %v887
        %v889 = vrot.slane %v888, 1
        %v890 = vadd.f32 %v888, %v889
        %v891 = vrot.slane %v707, 4
        %v892 = vadd.f32 %v707, %v891
        %v893 = vrot.slane %v892, 2
        %v894 = vadd.f32 %v892, %v893
        %v895 = vrot.slane %v894, 1
        %v896 = vadd.f32 %v894, %v895
        %v897 = vrot.slane %v708, 4
        %v898 = vadd.f32 %v708, %v897
        %v899 = vrot.slane %v898, 2
        %v900 = vadd.f32 %v898, %v899
        %v901 = vrot.slane %v900, 1
        %v902 = vadd.f32 %v900, %v901
        %v903 = vsel %vm308, %v709, 0.0
        %v904 = vrot.slane %v903, 4
        %v905 = vadd.f32 %v903, %v904
        %v906 = vrot.slane %v905, 2
        %v907 = vadd.f32 %v905, %v906
        %v908 = vrot.slane %v907, 1
        %v909 = vadd.f32 %v907, %v908
        %v942 = vsel %vm373, %v740, %v715
        %v943 = vsel %vm375, %v765, %v942
        %v944 = vsel %vm377, %v790, %v943
        %v945 = vsel %vm379, %v815, %v944
        %v946 = vsel %vm381, %v840, %v945
        %v947 = vsel %vm383, %v865, %v946
        %v948 = vsel %vm385, %v890, %v947
        %v949 = vsel %vm373, %v746, %v721
        %v950 = vsel %vm375, %v771, %v949
        %v951 = vsel %vm377, %v796, %v950
        %v952 = vsel %vm379, %v821, %v951
        %v953 = vsel %vm381, %v846, %v952
        %v954 = vsel %vm383, %v871, %v953
        %v955 = vsel %vm385, %v896, %v954
        %v956 = vsel %vm373, %v752, %v727
        %v957 = vsel %vm375, %v777, %v956
        %v958 = vsel %vm377, %v802, %v957
        %v959 = vsel %vm379, %v827, %v958
        %v960 = vsel %vm381, %v852, %v959
        %v961 = vsel %vm383, %v877, %v960
        %v962 = vsel %vm385, %v902, %v961
        %v963 = vsel %vm373, %v759, %v734
        %v964 = vsel %vm375, %v784, %v963
        %v965 = vsel %vm377, %v809, %v964
        %v966 = vsel %vm379, %v834, %v965
        %v967 = vsel %vm381, %v859, %v966
        %v968 = vsel %vm383, %v884, %v967
        %v969 = vsel %vm385, %v909, %v968
        %974 = vst [vmem:[%s215] sm:$0xff] %v948
        %975 = vst [vmem:[%s215 + $0x8] sm:$0xff] %v955
        %976 = vst [vmem:[%s215 + $0x10] sm:$0xff] %v962
        %977 = vst.msk [vmem:[%s215 + $0x18] sm:$0xff] %vm308, %v969
        %s978 = sand.u32 %s77, 1
        %s979 = scalar_lea.sflag [#allocation4], %s978
        %s980 = sand.u32 %s77, 1
        %s981 = smul.addr %s980, 32
        %s982 = scalar_lea.vmem [#allocation7], %s981
        %p983 = scmp.lt.s32.totalorder %s22, 2
        %s984 = scalar_select %p983, %s22, 2
        %s985 = smul.addr %s984, 8
        %s986 = scalar_lea.vmem %s3, %s985
        // Predicated region
        $region37: #{tpu_custom_call.1} parent=27 // pred_check
          %p987 = pneg %p87
        $region38: #{tpu_custom_call.1} parent=27 // pred_check_branch
          %989 = sbr.rel (%p987) target = $region40
        $region39: #{tpu_custom_call.1} parent=27 // pred_region
          %991 = vsyncadd %s979, 0
          %s992 = smul.addr %s22, 4
          %s993 = smul.addr %s992, 8
          %s994 = scalar_lea.hbm %s2, %s993
          %s996 = sshll.u32 %s982, 4
          %s997 = int_to_ptr.vmem [resolvable:$true] %s996
          %s998 = sshll.u32 %s994, 4
          %s999 = int_to_ptr.hbm [resolvable:$true] %s998
          %1001 = dma.vmem_to_hbm [thread:$0]  %s997, 512, %s999, %s979
        $region40: #{tpu_custom_call.1} parent=27 // pred_fallthru
          _
        // Predicated region
        $region41: #{tpu_custom_call.1} parent=27 // pred_check
          %p1002 = pneg %p113
        $region42: #{tpu_custom_call.1} parent=27 // pred_check_branch
          %1004 = sbr.rel (%p1002) target = $region44
        $region43: #{tpu_custom_call.1} parent=27 // pred_region
          _
        $region44: #{tpu_custom_call.1} parent=27 // pred_fallthru
          _
      $region28: #{tpu_custom_call.1} parent=5 // pred_fallthru
        _
      %p1005 = scmp.le.s32.totalorder 2, %s17
      // Predicated region
      $region45: #{tpu_custom_call.1} parent=5 // pred_check
        %p1006 = pneg %p1005
      $region46: #{tpu_custom_call.1} parent=5 // pred_check_branch
        %1008 = sbr.rel (%p1006) target = $region48
      $region47: #{tpu_custom_call.1} parent=5 // pred_region
        %s1009 = ssub.s32 %s17, 2
        // Predicated region
        $region49: #{tpu_custom_call.1} parent=47 // pred_check
          %p1010 = pneg %p93
        $region50: #{tpu_custom_call.1} parent=47 // pred_check_branch
          %1012 = sbr.rel (%p1010) target = $region52
        $region51: #{tpu_custom_call.1} parent=47 // pred_region
          %s1013 = sand.u32 %s78, 1
          %s1014 = scalar_lea.sflag [#allocation4], %s1013
          %s1015 = sand.u32 %s78, 1
          %s1016 = smul.addr %s1015, 32
          %s1017 = scalar_lea.vmem [#allocation7], %s1016
          %1019 = dma.done %s1014, 512
        $region52: #{tpu_custom_call.1} parent=47 // pred_fallthru
          _
        // Predicated region
        $region53: #{tpu_custom_call.1} parent=47 // pred_check
          %p1020 = pneg %p119
        $region54: #{tpu_custom_call.1} parent=47 // pred_check_branch
          %1022 = sbr.rel (%p1020) target = $region56
        $region55: #{tpu_custom_call.1} parent=47 // pred_region
          %p1023 = scmp.lt.s32.totalorder %s23, 2
          %s1024 = scalar_select %p1023, %s23, 2
          %s1025 = smul.addr %s1024, 8
          %s1026 = scalar_lea.vmem %s3, %s1025
        $region56: #{tpu_custom_call.1} parent=47 // pred_fallthru
          _
      $region48: #{tpu_custom_call.1} parent=5 // pred_fallthru
        _
    $region6: #{tpu_custom_call.1} parent=1 // loop_footer
      %s21 = sadd.s32 1, %s17
    $region7: #{tpu_custom_call.1} parent=1 // loop_footer_branch
      %16 = sbr.rel target = $region3
    $region8: #{tpu_custom_call.1} parent=1 // loop_exit
      _
    %1027 = vsyncpa [#allocation3], 1
    %s1028 = scalar_lea.sflag [#allocation3], 1
    %1029 = vsyncpa %s1028, 1
    %1030 = vsyncpa [#allocation6], 1
    %1031 = vsyncpa [#allocation4], 1
    %s1032 = scalar_lea.sflag [#allocation4], 1
    %1033 = vsyncpa %s1032, 1

</llo_original>
